<compile_context>
chip_gen: v7x
topology: tpu7x:2x2x1
jax: 0.10.0
libtpu: 0.0.40
codegen_flags: <defaults>
</compile_context>

<pallas_src>
import functools

import jax
import jax.numpy as jnp
from jax.experimental import pallas as pl
from jax.experimental.pallas import tpu as pltpu

NUM_ATOM_TYPES = 100           # nn.Embedding(100, hidden_channels)
VMEM_LIMIT = 32 * 1024 * 1024  # safe on v5e/v6e/v7x (tiles are far smaller)


def _round_up(x, m):
    return ((x + m - 1) // m) * m


def _pad2(a, rows, cols, dtype):
    r, c = a.shape
    return jnp.pad(a, ((0, rows - r), (0, cols - c))).astype(dtype)


# ----------------------------------------------------------------------------
# Kernel 1: initial node embedding (f_initial_embed / f_pos_embed / f_combine
# fused into two matmuls + one bias + ReLU; algebraically exact fold).
#   x0 = relu( atom @ W_ca + pos @ W_pc + b_eff )
# ----------------------------------------------------------------------------
def _init_embed_kernel(atom_ref, pos_ref, w_ca_ref, w_pc_ref, b_ref, x_ref):
    f32 = jnp.float32
    x = (jnp.dot(atom_ref[...], w_ca_ref[...], preferred_element_type=f32)
         + jnp.dot(pos_ref[...], w_pc_ref[...], preferred_element_type=f32)
         + b_ref[...])
    x_ref[...] = jnp.maximum(x, 0.0).astype(x_ref.dtype)


def _initial_embed(atom, pos, w_ca, w_pc, b_eff, tile):
    n_pad, h_pad = atom.shape
    s_pad = pos.shape[1]
    grid_spec = pltpu.PrefetchScalarGridSpec(
        num_scalar_prefetch=0,
        grid=(n_pad // tile,),
        in_specs=[
            pl.BlockSpec((tile, h_pad), lambda i: (i, 0)),
            pl.BlockSpec((tile, s_pad), lambda i: (i, 0)),
            pl.BlockSpec((h_pad, h_pad), lambda i: (0, 0)),
            pl.BlockSpec((s_pad, h_pad), lambda i: (0, 0)),
            pl.BlockSpec((1, h_pad), lambda i: (0, 0)),
        ],
        out_specs=pl.BlockSpec((tile, h_pad), lambda i: (i, 0)),
    )
    return pl.pallas_call(
        _init_embed_kernel,
        out_shape=jax.ShapeDtypeStruct((n_pad, h_pad), jnp.bfloat16),
        grid_spec=grid_spec,
        compiler_params=pltpu.CompilerParams(
            dimension_semantics=("parallel",),
            vmem_limit_bytes=VMEM_LIMIT),
    )(atom, pos, w_ca, w_pc, b_eff)


# ----------------------------------------------------------------------------
# Kernel 2: one GINConv layer (eps = 0, self-loop folded into adj) + its MLP
#   h_i = MLP( sum_j (adj + I)[i, j] * x_j ),  MLP = Linear -> ReLU -> Linear
# Grid: (node blocks [parallel], adjacency K blocks [arbitrary, reduction]).
# ----------------------------------------------------------------------------
def _gin_conv_kernel(adj_ref, x_ref, w1_ref, b1_ref, w2_ref, b2_ref,
                     out_ref, acc_ref, *, apply_act):
    f32 = jnp.float32
    k = pl.program_id(1)

    @pl.when(k == 0)
    def _():
        acc_ref[...] = jnp.zeros_like(acc_ref)

    acc_ref[...] += jnp.dot(adj_ref[...], x_ref[...],
                            preferred_element_type=f32)     # (self + neighbours)

    @pl.when(k == pl.num_programs(1) - 1)
    def _():
        h = jnp.dot(acc_ref[...].astype(w1_ref.dtype), w1_ref[...],
                    preferred_element_type=f32) + b1_ref[...]
        h = jnp.maximum(h, 0.0)
        h = jnp.dot(h.astype(w2_ref.dtype), w2_ref[...],
                    preferred_element_type=f32) + b2_ref[...]
        if apply_act:                                        # inter-layer ReLU only
            h = jnp.maximum(h, 0.0)
        out_ref[...] = h.astype(out_ref.dtype)


def _gin_conv(x, adj_self, w1, b1, w2, b2, *, apply_act, tile_m, tile_k):
    n_pad, in_pad = x.shape
    mid_pad = w1.shape[1]
    out_pad = w2.shape[1]
    kernel = functools.partial(_gin_conv_kernel, apply_act=apply_act)
    grid_spec = pltpu.PrefetchScalarGridSpec(
        num_scalar_prefetch=0,
        grid=(n_pad // tile_m, n_pad // tile_k),
        in_specs=[
            pl.BlockSpec((tile_m, tile_k), lambda i, k: (i, k)),   # adj+I tile
            pl.BlockSpec((tile_k, in_pad), lambda i, k: (k, 0)),   # node feats
            pl.BlockSpec((in_pad, mid_pad), lambda i, k: (0, 0)),
            pl.BlockSpec((1, mid_pad), lambda i, k: (0, 0)),
            pl.BlockSpec((mid_pad, out_pad), lambda i, k: (0, 0)),
            pl.BlockSpec((1, out_pad), lambda i, k: (0, 0)),
        ],
        out_specs=pl.BlockSpec((tile_m, out_pad), lambda i, k: (i, 0)),
        scratch_shapes=[pltpu.VMEM((tile_m, in_pad), jnp.float32)],
    )
    return pl.pallas_call(
        kernel,
        out_shape=jax.ShapeDtypeStruct((n_pad, out_pad), jnp.bfloat16),
        grid_spec=grid_spec,
        compiler_params=pltpu.CompilerParams(
            dimension_semantics=("parallel", "arbitrary"),
            vmem_limit_bytes=VMEM_LIMIT),
    )(adj_self, x, w1, b1, w2, b2)


# ----------------------------------------------------------------------------
# Kernel 3: readout -- SumAggregation over batch index + f_predict MLP.
# Tiled over node blocks with an f32 (G, F) accumulator; output is a
# lane-dense (G, 128) slab (wrapper slices column 0).
# ----------------------------------------------------------------------------
def _readout_kernel(batch_oh_ref, x_ref, w1_ref, b1_ref, w2_ref, b2_ref,
                    out_ref, acc_ref):
    f32 = jnp.float32
    i = pl.program_id(0)

    @pl.when(i == 0)
    def _():
        acc_ref[...] = jnp.zeros_like(acc_ref)

    acc_ref[...] += jnp.dot(batch_oh_ref[...], x_ref[...],
                            preferred_element_type=f32)

    @pl.when(i == pl.num_programs(0) - 1)
    def _():
        p = jnp.dot(acc_ref[...].astype(w1_ref.dtype), w1_ref[...],
                    preferred_element_type=f32) + b1_ref[...]
        p = jnp.maximum(p, 0.0)
        out_ref[...] = (jnp.dot(p.astype(w2_ref.dtype), w2_ref[...],
                                preferred_element_type=f32) + b2_ref[...])


def _readout(batch_oh, x, w1, b1, w2, b2, tile):
    g = batch_oh.shape[0]
    n_pad, f_pad = x.shape
    out_lanes = w2.shape[1]
    grid_spec = pltpu.PrefetchScalarGridSpec(
        num_scalar_prefetch=0,
        grid=(n_pad // tile,),
        in_specs=[
            pl.BlockSpec((g, tile), lambda i: (0, i)),
            pl.BlockSpec((tile, f_pad), lambda i: (i, 0)),
            pl.BlockSpec((f_pad, f_pad), lambda i: (0, 0)),
            pl.BlockSpec((1, f_pad), lambda i: (0, 0)),
            pl.BlockSpec((f_pad, out_lanes), lambda i: (0, 0)),
            pl.BlockSpec((1, out_lanes), lambda i: (0, 0)),
        ],
        out_specs=pl.BlockSpec((g, out_lanes), lambda i: (0, 0)),
        scratch_shapes=[pltpu.VMEM((g, f_pad), jnp.float32)],
    )
    return pl.pallas_call(
        _readout_kernel,
        out_shape=jax.ShapeDtypeStruct((g, out_lanes), jnp.float32),
        grid_spec=grid_spec,
        compiler_params=pltpu.CompilerParams(
            dimension_semantics=("arbitrary",),
            vmem_limit_bytes=VMEM_LIMIT),
    )(batch_oh, x, w1, b1, w2, b2)


# ----------------------------------------------------------------------------
# JAX glue: gather embedding, densify graph structure, pad to tile/lane sizes.
# ----------------------------------------------------------------------------
def naive_euclidean_gnn(z, pos, edge_index, batch, params, num_graphs, *, tile=256):
    bf16, f32 = jnp.bfloat16, jnp.float32
    n = z.shape[0]
    hidden = params["emb"].shape[1]
    final = params["w_pred1"].shape[0]
    num_layers = len(params["gin"])

    tile = min(tile, _round_up(n, 128))     # small graphs -> small tiles
    n_pad = _round_up(n, tile)
    h_pad = _round_up(hidden, 128)
    f_pad = _round_up(final, 128)
    s_pad = 128                             # lane-dense position slab

    # f_initial_embed: exact gather in XLA (no one-hot matmul in-kernel).
    atom = jnp.take(params["emb"], z, axis=0)                         # (N, H)
    atom_p = _pad2(atom, n_pad, h_pad, bf16)
    pos_p = _pad2(pos.astype(f32), n_pad, s_pad, bf16)

    # Fold f_pos_embed + f_combine (no nonlinearity in between):
    #   x0 = relu(atom @ W_ca + pos @ (W_pos @ W_cp) + (b_pos @ W_cp + b_comb))
    w_pc = params["w_pos"] @ params["w_comb_p"]                       # (S, H)
    b_eff = params["b_pos"] @ params["w_comb_p"] + params["b_comb"]   # (1, H)
    w_ca = _pad2(params["w_comb_a"], h_pad, h_pad, bf16)
    w_pc = _pad2(w_pc, s_pad, h_pad, bf16)
    b_eff = _pad2(b_eff, 1, h_pad, f32)

    # Dense adjacency with self loops folded in (eps = 0):
    #   adj[i, j] = #edges j -> i, plus I. Counts exact in bf16 (< 256).
    src, dst = edge_index[0], edge_index[1]
    diag = jnp.arange(n_pad)
    adj = (jnp.zeros((n_pad, n_pad), f32)
           .at[dst, src].add(1.0)
           .at[diag, diag].add(1.0)).astype(bf16)
    # TODO(synk): for large sparse graphs (E << N^2) replace the dense adj matmul
    # with a scalar-prefetched segment-sum (PrefetchScalarGridSpec edge offsets).

    # Graph one-hot (G, N_pad); padded nodes get an out-of-range index -> zeros.
    batch_p = jnp.concatenate(
        [batch, jnp.full((n_pad - n,), num_graphs, batch.dtype)])
    batch_oh = jnp.transpose(
        jax.nn.one_hot(batch_p, num_graphs, dtype=f32)).astype(bf16)  # (G, N_pad)

    # Padded / bf16 readout parameters (zero padding is exact here).
    w_p1 = _pad2(params["w_pred1"], f_pad, f_pad, bf16)
    b_p1 = _pad2(params["b_pred1"], 1, f_pad, f32)
    w_p2 = _pad2(params["w_pred2"], f_pad, 128, bf16)
    b_p2 = _pad2(params["b_pred2"], 1, 128, f32)

    # Prologue kernel: initial node embedding.
    x = _initial_embed(atom_p, pos_p, w_ca, w_pc, b_eff, tile)

    # GIN layers (per-layer weights -> final_embedding_size != hidden works).
    for l, layer in enumerate(params["gin"]):
        in_p = _round_up(layer["w1"].shape[0], 128)
        mid_p = _round_up(layer["w1"].shape[1], 128)
        out_p = _round_up(layer["w2"].shape[1], 128)
        x = _gin_conv(
            x, adj,
            _pad2(layer["w1"], in_p, mid_p, bf16),
            _pad2(layer["b1"], 1, mid_p, f32),
            _pad2(layer["w2"], mid_p, out_p, bf16),
            _pad2(layer["b2"], 1, out_p, f32),
            apply_act=(l < num_layers - 1),
            tile_m=tile, tile_k=tile)

    # Readout kernel: SumAggregation + f_predict (lane-dense output slab).
    out = _readout(batch_oh, x, w_p1, b_p1, w_p2, b_p2, tile)
    return out[:, :1]


# ----------------------------------------------------------------------------
# Deterministic synthetic parameters matching the module's shapes.
# ----------------------------------------------------------------------------
def init_params(key, hidden, num_layers, num_spatial_dims, final):
    ks = iter(jax.random.split(key, 16 + 4 * num_layers))

    def lin_w(k, fan_in, fan_out):
        return jax.random.normal(k, (fan_in, fan_out), jnp.float32) / jnp.sqrt(float(fan_in))

    def lin_b(k, fan_out):
        return 0.01 * jax.random.normal(k, (1, fan_out), jnp.float32)

    p = {}
    p["emb"] = jax.random.normal(next(ks), (NUM_ATOM_TYPES, hidden), jnp.float32)
    p["w_pos"] = lin_w(next(ks), num_spatial_dims, hidden)
    p["b_pos"] = lin_b(next(ks), hidden)
    # f_combine Linear(2H, H) split into atom-half / pos-half of the weight.
    p["w_comb_a"] = lin_w(next(ks), hidden, hidden)
    p["w_comb_p"] = lin_w(next(ks), hidden, hidden)
    p["b_comb"] = lin_b(next(ks), hidden)
    # GIN (PyG BasicGNN): conv l has MLP([in_l, out_l, out_l]); only the last
    # conv maps to final_embedding_size.
    gin = []
    for l in range(num_layers):
        out_l = final if l == num_layers - 1 else hidden
        gin.append(dict(w1=lin_w(next(ks), hidden, out_l),
                        b1=lin_b(next(ks), out_l),
                        w2=lin_w(next(ks), out_l, out_l),
                        b2=lin_b(next(ks), out_l)))
    p["gin"] = gin
    # f_predict: Linear(F, F) -> ReLU -> Linear(F, 1)
    p["w_pred1"] = lin_w(next(ks), final, final)
    p["b_pred1"] = lin_b(next(ks), final)
    p["w_pred2"] = lin_w(next(ks), final, 1)
    p["b_pred2"] = lin_b(next(ks), 1)
    return p


if __name__ == "__main__":
    hidden_channels = 32
    num_layers = 3
    num_spatial_dims = 3
    final_embedding_size = hidden_channels   # final_embedding_size=None -> hidden
    num_nodes = 16
    num_edges = 40
    num_graphs = 2

    key = jax.random.PRNGKey(0)
    k_z, k_pos, k_src, k_dst, k_par = jax.random.split(key, 5)

    z = jax.random.randint(k_z, (num_nodes,), 0, NUM_ATOM_TYPES, dtype=jnp.int32)
    pos = jax.random.normal(k_pos, (num_nodes, num_spatial_dims), jnp.float32)
    src = jax.random.randint(k_src, (num_edges,), 0, num_nodes, dtype=jnp.int32)
    dst = jax.random.randint(k_dst, (num_edges,), 0, num_nodes, dtype=jnp.int32)
    edge_index = jnp.stack([src, dst])                                 # (2, E)
    batch = jnp.concatenate([jnp.zeros(num_nodes // 2, jnp.int32),
                             jnp.ones(num_nodes - num_nodes // 2, jnp.int32)])

    params = init_params(k_par, hidden_channels, num_layers,
                         num_spatial_dims, final_embedding_size)

    out = naive_euclidean_gnn(z, pos, edge_index, batch, params, num_graphs)
    jax.block_until_ready(out)
    assert out.shape == (num_graphs, 1) and out.dtype == jnp.float32
    print("KERNEL_OK")
</pallas_src>

<mosaic_0001>
module attributes {stable_mosaic.version = 11 : i64} {
  func.func @_init_embed_kernel(%arg0: i32, %arg1: memref<128x128xbf16, #tpu.memory_space<vmem>>, %arg2: memref<128x128xbf16, #tpu.memory_space<vmem>>, %arg3: memref<128x128xbf16, #tpu.memory_space<vmem>>, %arg4: memref<128x128xbf16, #tpu.memory_space<vmem>>, %arg5: memref<1x128xf32, #tpu.memory_space<vmem>>, %arg6: memref<128x128xbf16, #tpu.memory_space<vmem>>) attributes {dimension_semantics = [#tpu.dimension_semantics<parallel>], iteration_bounds = array<i64: 1>, scalar_prefetch = 0 : i64, scratch_operands = 0 : i64, tpu.core_type = #tpu.core_type<tc>, window_params = [{transform_indices = @transform_0, window_bounds = array<i64: 128, 128>}, {transform_indices = @transform_1, window_bounds = array<i64: 128, 128>}, {pipeline_mode = #tpu.pipeline_mode<synchronous>, transform_indices = @transform_2, window_bounds = array<i64: 128, 128>}, {pipeline_mode = #tpu.pipeline_mode<synchronous>, transform_indices = @transform_3, window_bounds = array<i64: 128, 128>}, {pipeline_mode = #tpu.pipeline_mode<synchronous>, transform_indices = @transform_4, window_bounds = array<i64: 1, 128>}, {transform_indices = @transform_5, window_bounds = array<i64: 128, 128>}]} {
    %c0 = arith.constant 0 : index
    %c0_0 = arith.constant 0 : index
    %0 = vector.load %arg1[%c0, %c0_0] : memref<128x128xbf16, #tpu.memory_space<vmem>>, vector<128x128xbf16>
    %c0_1 = arith.constant 0 : index
    %c0_2 = arith.constant 0 : index
    %1 = vector.load %arg3[%c0_1, %c0_2] : memref<128x128xbf16, #tpu.memory_space<vmem>>, vector<128x128xbf16>
    %cst = arith.constant dense<0.000000e+00> : vector<128x128xf32>
    %2 = tpu.matmul %0, %1, %cst {dimension_numbers = #tpu.dot_dimension_numbers<[1], [0], [0], [1], [0, 0, 1, 1], [], []>} : vector<128x128xbf16>, vector<128x128xbf16>, vector<128x128xf32> -> vector<128x128xf32>
    %c0_3 = arith.constant 0 : index
    %c0_4 = arith.constant 0 : index
    %3 = vector.load %arg2[%c0_3, %c0_4] : memref<128x128xbf16, #tpu.memory_space<vmem>>, vector<128x128xbf16>
    %c0_5 = arith.constant 0 : index
    %c0_6 = arith.constant 0 : index
    %4 = vector.load %arg4[%c0_5, %c0_6] : memref<128x128xbf16, #tpu.memory_space<vmem>>, vector<128x128xbf16>
    %cst_7 = arith.constant dense<0.000000e+00> : vector<128x128xf32>
    %5 = tpu.matmul %3, %4, %cst_7 {dimension_numbers = #tpu.dot_dimension_numbers<[1], [0], [0], [1], [0, 0, 1, 1], [], []>} : vector<128x128xbf16>, vector<128x128xbf16>, vector<128x128xf32> -> vector<128x128xf32>
    %6 = arith.addf %2, %5 : vector<128x128xf32>
    %c0_8 = arith.constant 0 : index
    %c0_9 = arith.constant 0 : index
    %7 = vector.load %arg5[%c0_8, %c0_9] : memref<1x128xf32, #tpu.memory_space<vmem>>, vector<1x128xf32>
    %8 = vector.broadcast %7 : vector<1x128xf32> to vector<128x128xf32>
    %9 = arith.addf %6, %8 : vector<128x128xf32>
    %cst_10 = arith.constant 0.000000e+00 : f32
    %10 = vector.broadcast %cst_10 : f32 to vector<128x128xf32>
    %11 = arith.maximumf %9, %10 : vector<128x128xf32>
    %12 = arith.truncf %11 : vector<128x128xf32> to vector<128x128xbf16>
    %c0_11 = arith.constant 0 : index
    %c0_12 = arith.constant 0 : index
    %13 = vector.load %arg6[%c0_11, %c0_12] : memref<128x128xbf16, #tpu.memory_space<vmem>>, vector<128x128xbf16>
    tpu.vector_store %arg6[%c0_11, %c0_12], %12 {strides = array<i32>} : memref<128x128xbf16, #tpu.memory_space<vmem>>, vector<128x128xbf16>,
    return
  }
  func.func @transform_0(%arg0: i32) -> (i32, i32) {
    %c0_i32 = arith.constant 0 : i32
    %c0_i32_0 = arith.constant 0 : i32
    return %arg0, %c0_i32 : i32, i32
  }
  func.func @transform_1(%arg0: i32) -> (i32, i32) {
    %c0_i32 = arith.constant 0 : i32
    %c0_i32_0 = arith.constant 0 : i32
    return %arg0, %c0_i32 : i32, i32
  }
  func.func @transform_2(%arg0: i32) -> (i32, i32) {
    %c0_i32 = arith.constant 0 : i32
    %c0_i32_0 = arith.constant 0 : i32
    %c0_i32_1 = arith.constant 0 : i32
    return %c0_i32, %c0_i32_0 : i32, i32
  }
  func.func @transform_3(%arg0: i32) -> (i32, i32) {
    %c0_i32 = arith.constant 0 : i32
    %c0_i32_0 = arith.constant 0 : i32
    %c0_i32_1 = arith.constant 0 : i32
    return %c0_i32, %c0_i32_0 : i32, i32
  }
  func.func @transform_4(%arg0: i32) -> (i32, i32) {
    %c0_i32 = arith.constant 0 : i32
    %c0_i32_0 = arith.constant 0 : i32
    %c0_i32_1 = arith.constant 0 : i32
    return %c0_i32, %c0_i32_0 : i32, i32
  }
  func.func @transform_5(%arg0: i32) -> (i32, i32) {
    %c0_i32 = arith.constant 0 : i32
    %c0_i32_0 = arith.constant 0 : i32
    return %arg0, %c0_i32 : i32, i32
  }
}

</mosaic_0001>

<llo_original>
// kernel: tpu_custom_call.1
$region0: #{tpu_custom_call.1}
  #allocation0 [shape = 'u32[]', space=smem, size = 0x4, offset = 0x4, fixed_abs, tag = 'smem constant byte address 0x4 - core index']
  #allocation1 [shape = 'u32[144,128]{1,0:T(1,128)}', space=vmem, size = 0x12000, scoped, tag = 'internal scratch']
  %s0 = inlined_call_operand.hbm [shape: bf16[128,128], index: 0, kind: input, shape index: {}]
  %s1 = inlined_call_operand.hbm [shape: bf16[128,128], index: 1, kind: input, shape index: {}]
  %s2 = inlined_call_operand.hbm [shape: bf16[128,128], index: 2, kind: input, shape index: {}]
  %s3 = inlined_call_operand.hbm [shape: bf16[128,128], index: 3, kind: input, shape index: {}]
  %s4 = inlined_call_operand.vmem [shape: f32[1,128], index: 4, kind: input, shape index: {}]
  %s5 = inlined_call_operand.hbm [shape: bf16[128,128], index: 5, kind: output, shape index: {}]
  %s6 = sld [smem:[#allocation0]]
  $region46: #{tpu_custom_call.1} parent=0
    _
  %s8 = ssub.s32 1, %s6
  %s9 = scalar_select 0, %s8, %s6
  $region1: #{tpu_custom_call.1} parent=0
    #allocation2 [shape = 'u8[32768]{0}', space=vmem, size = 0x8000, scoped, tag = 'input window, operand 0, single buffered']
    #allocation3 [shape = 's32[1]{0}', space=sflag, size = 0x4, scoped, tag = 'scoped memory for tpu_custom_call.1']
    #allocation4 [shape = 's32[1]{0}', space=sflag, size = 0x4, scoped, tag = 'scoped memory for tpu_custom_call.1']
    #allocation5 [shape = 'u8[32768]{0}', space=vmem, size = 0x8000, scoped, tag = 'input window, operand 1, single buffered']
    #allocation6 [shape = 's32[1]{0}', space=sflag, size = 0x4, scoped, tag = 'scoped memory for tpu_custom_call.1']
    #allocation7 [shape = 'u8[32768]{0}', space=vmem, size = 0x8000, scoped, tag = 'input window, operand 2, single buffered']
    #allocation8 [shape = 'u8[32768]{0}', space=vmem, size = 0x8000, scoped, tag = 'input window, operand 3, single buffered']
    #allocation9 [shape = 's32[1]{0}', space=sflag, size = 0x4, scoped, tag = 'scoped memory for tpu_custom_call.1']
    #allocation10 [shape = 'u8[32768]{0}', space=vmem, size = 0x8000, scoped, tag = 'output window, operand 0, single buffered']
    %10 = vsyncpa [#allocation3], 0
    %11 = vsyncpa [#allocation6], 0
    %12 = vsyncpa [#allocation9], 0
    %13 = vsyncpa [#allocation4], 0
    // Predicated region
    $region2: #{tpu_custom_call.1} parent=1 // pred_check
      _
    $region3: #{tpu_custom_call.1} parent=1 // pred_check_branch
      %15 = sbr.rel (0) target = $region5
    $region4: #{tpu_custom_call.1} parent=1 // pred_region
      %s17 = ssub.s32 1024, 1024
      %18 = vsyncadd [#allocation3], %s17
      %s19 = sshll.u32 [#allocation2], 4
      %s20 = int_to_ptr.vmem [resolvable:$true] %s19
      %25 = dma.hbm_to_vmem [thread:$0]  %s0, 1024, %s20, [#allocation3], 64, 64, 4
    $region5: #{tpu_custom_call.1} parent=1 // pred_fallthru
      _
    // Predicated region
    $region6: #{tpu_custom_call.1} parent=1 // pred_check
      _
    $region7: #{tpu_custom_call.1} parent=1 // pred_check_branch
      %27 = sbr.rel (0) target = $region9
    $region8: #{tpu_custom_call.1} parent=1 // pred_region
      %s29 = ssub.s32 1024, 1024
      %30 = vsyncadd [#allocation6], %s29
      %s31 = sshll.u32 [#allocation5], 4
      %s32 = int_to_ptr.vmem [resolvable:$true] %s31
      %37 = dma.hbm_to_vmem [thread:$0]  %s1, 1024, %s32, [#allocation6], 64, 64, 4
    $region9: #{tpu_custom_call.1} parent=1 // pred_fallthru
      _
    // Predicated region
    $region10: #{tpu_custom_call.1} parent=1 // pred_check
      _
    $region11: #{tpu_custom_call.1} parent=1 // pred_check_branch
      %39 = sbr.rel (0) target = $region13
    $region12: #{tpu_custom_call.1} parent=1 // pred_region
      %s41 = ssub.s32 1024, 1024
      %42 = vsyncadd [#allocation6], %s41
      %s43 = sshll.u32 [#allocation7], 4
      %s44 = int_to_ptr.vmem [resolvable:$true] %s43
      %49 = dma.hbm_to_vmem [thread:$0]  %s2, 1024, %s44, [#allocation6], 64, 64, 4
    $region13: #{tpu_custom_call.1} parent=1 // pred_fallthru
      _
    // Predicated region
    $region14: #{tpu_custom_call.1} parent=1 // pred_check
      _
    $region15: #{tpu_custom_call.1} parent=1 // pred_check_branch
      %51 = sbr.rel (0) target = $region17
    $region16: #{tpu_custom_call.1} parent=1 // pred_region
      %s53 = ssub.s32 1024, 1024
      %54 = vsyncadd [#allocation9], %s53
      %s55 = sshll.u32 [#allocation8], 4
      %s56 = int_to_ptr.vmem [resolvable:$true] %s55
      %61 = dma.hbm_to_vmem [thread:$0]  %s3, 1024, %s56, [#allocation9], 64, 64, 4
    $region17: #{tpu_custom_call.1} parent=1 // pred_fallthru
      _
    // Predicated region
    $region18: #{tpu_custom_call.1} parent=1 // pred_check
      _
    $region19: #{tpu_custom_call.1} parent=1 // pred_check_branch
      %63 = sbr.rel (0) target = $region21
    $region20: #{tpu_custom_call.1} parent=1 // pred_region
      _
    $region21: #{tpu_custom_call.1} parent=1 // pred_fallthru
      _
    // Predicated region
    $region22: #{tpu_custom_call.1} parent=1 // pred_check
      _
    $region23: #{tpu_custom_call.1} parent=1 // pred_check_branch
      %65 = sbr.rel (0) target = $region25
    $region24: #{tpu_custom_call.1} parent=1 // pred_region
      %66 = dma.done [#allocation3], 1024
    $region25: #{tpu_custom_call.1} parent=1 // pred_fallthru
      _
    // Predicated region
    $region26: #{tpu_custom_call.1} parent=1 // pred_check
      _
    $region27: #{tpu_custom_call.1} parent=1 // pred_check_branch
      %68 = sbr.rel (0) target = $region29
    $region28: #{tpu_custom_call.1} parent=1 // pred_region
      %69 = dma.done [#allocation6], 1024
    $region29: #{tpu_custom_call.1} parent=1 // pred_fallthru
      _
    // Predicated region
    $region30: #{tpu_custom_call.1} parent=1 // pred_check
      _
    $region31: #{tpu_custom_call.1} parent=1 // pred_check_branch
      %71 = sbr.rel (0) target = $region33
    $region32: #{tpu_custom_call.1} parent=1 // pred_region
      %72 = dma.done [#allocation6], 1024
    $region33: #{tpu_custom_call.1} parent=1 // pred_fallthru
      _
    // Predicated region
    $region34: #{tpu_custom_call.1} parent=1 // pred_check
      _
    $region35: #{tpu_custom_call.1} parent=1 // pred_check_branch
      %74 = sbr.rel (0) target = $region37
    $region36: #{tpu_custom_call.1} parent=1 // pred_region
      %75 = dma.done [#allocation9], 1024
    $region37: #{tpu_custom_call.1} parent=1 // pred_fallthru
      _
    %v77 = vld [vmem:[#allocation2] sm:$0xf]
    %v78 = vld [vmem:[#allocation2 + $0x4] sm:$0xf]
    %v79 = vld [vmem:[#allocation2 + $0x8] sm:$0xf]
    %v80 = vld [vmem:[#allocation2 + $0xc] sm:$0xf]
    %v81 = vld [vmem:[#allocation2 + $0x10] sm:$0xf]
    %v82 = vld [vmem:[#allocation2 + $0x14] sm:$0xf]
    %v83 = vld [vmem:[#allocation2 + $0x18] sm:$0xf]
    %v84 = vld [vmem:[#allocation2 + $0x1c] sm:$0xf]
    %v85 = vld [vmem:[#allocation2 + $0x20] sm:$0xf]
    %v86 = vld [vmem:[#allocation2 + $0x24] sm:$0xf]
    %v87 = vld [vmem:[#allocation2 + $0x28] sm:$0xf]
    %v88 = vld [vmem:[#allocation2 + $0x2c] sm:$0xf]
    %v89 = vld [vmem:[#allocation2 + $0x30] sm:$0xf]
    %v90 = vld [vmem:[#allocation2 + $0x34] sm:$0xf]
    %v91 = vld [vmem:[#allocation2 + $0x38] sm:$0xf]
    %v92 = vld [vmem:[#allocation2 + $0x3c] sm:$0xf]
    %v93 = vld [vmem:[#allocation7] sm:$0xf]
    %v94 = vld [vmem:[#allocation7 + $0x4] sm:$0xf]
    %v95 = vld [vmem:[#allocation7 + $0x8] sm:$0xf]
    %v96 = vld [vmem:[#allocation7 + $0xc] sm:$0xf]
    %v97 = vld [vmem:[#allocation7 + $0x10] sm:$0xf]
    %v98 = vld [vmem:[#allocation7 + $0x14] sm:$0xf]
    %v99 = vld [vmem:[#allocation7 + $0x18] sm:$0xf]
    %v100 = vld [vmem:[#allocation7 + $0x1c] sm:$0xf]
    %v101 = vld [vmem:[#allocation7 + $0x20] sm:$0xf]
    %v102 = vld [vmem:[#allocation7 + $0x24] sm:$0xf]
    %v103 = vld [vmem:[#allocation7 + $0x28] sm:$0xf]
    %v104 = vld [vmem:[#allocation7 + $0x2c] sm:$0xf]
    %v105 = vld [vmem:[#allocation7 + $0x30] sm:$0xf]
    %v106 = vld [vmem:[#allocation7 + $0x34] sm:$0xf]
    %v107 = vld [vmem:[#allocation7 + $0x38] sm:$0xf]
    %v108 = vld [vmem:[#allocation7 + $0x3c] sm:$0xf]
    %v109 = vld [vmem:[#allocation5] sm:$0xf]
    %v110 = vld [vmem:[#allocation5 + $0x4] sm:$0xf]
    %v111 = vld [vmem:[#allocation5 + $0x8] sm:$0xf]
    %v112 = vld [vmem:[#allocation5 + $0xc] sm:$0xf]
    %v113 = vld [vmem:[#allocation5 + $0x10] sm:$0xf]
    %v114 = vld [vmem:[#allocation5 + $0x14] sm:$0xf]
    %v115 = vld [vmem:[#allocation5 + $0x18] sm:$0xf]
    %v116 = vld [vmem:[#allocation5 + $0x1c] sm:$0xf]
    %v117 = vld [vmem:[#allocation5 + $0x20] sm:$0xf]
    %v118 = vld [vmem:[#allocation5 + $0x24] sm:$0xf]
    %v119 = vld [vmem:[#allocation5 + $0x28] sm:$0xf]
    %v120 = vld [vmem:[#allocation5 + $0x2c] sm:$0xf]
    %v121 = vld [vmem:[#allocation5 + $0x30] sm:$0xf]
    %v122 = vld [vmem:[#allocation5 + $0x34] sm:$0xf]
    %v123 = vld [vmem:[#allocation5 + $0x38] sm:$0xf]
    %v124 = vld [vmem:[#allocation5 + $0x3c] sm:$0xf]
    %v125 = vld [vmem:[#allocation8] sm:$0xf]
    %v126 = vld [vmem:[#allocation8 + $0x4] sm:$0xf]
    %v127 = vld [vmem:[#allocation8 + $0x8] sm:$0xf]
    %v128 = vld [vmem:[#allocation8 + $0xc] sm:$0xf]
    %v129 = vld [vmem:[#allocation8 + $0x10] sm:$0xf]
    %v130 = vld [vmem:[#allocation8 + $0x14] sm:$0xf]
    %v131 = vld [vmem:[#allocation8 + $0x18] sm:$0xf]
    %v132 = vld [vmem:[#allocation8 + $0x1c] sm:$0xf]
    %v133 = vld [vmem:[#allocation8 + $0x20] sm:$0xf]
    %v134 = vld [vmem:[#allocation8 + $0x24] sm:$0xf]
    %v135 = vld [vmem:[#allocation8 + $0x28] sm:$0xf]
    %v136 = vld [vmem:[#allocation8 + $0x2c] sm:$0xf]
    %v137 = vld [vmem:[#allocation8 + $0x30] sm:$0xf]
    %v138 = vld [vmem:[#allocation8 + $0x34] sm:$0xf]
    %v139 = vld [vmem:[#allocation8 + $0x38] sm:$0xf]
    %v140 = vld [vmem:[#allocation8 + $0x3c] sm:$0xf]
    %v157 = vunpack.c.l.b16 %v109
    %v158 = vunpack.c.l.b16 %v110
    %v159 = vunpack.c.l.b16 %v111
    %v160 = vunpack.c.l.b16 %v112
    %v161 = vunpack.c.l.b16 %v113
    %v162 = vunpack.c.l.b16 %v114
    %v163 = vunpack.c.l.b16 %v115
    %v164 = vunpack.c.l.b16 %v116
    %v165 = vunpack.c.l.b16 %v117
    %v166 = vunpack.c.l.b16 %v118
    %v167 = vunpack.c.l.b16 %v119
    %v168 = vunpack.c.l.b16 %v120
    %v169 = vunpack.c.l.b16 %v121
    %v170 = vunpack.c.l.b16 %v122
    %v171 = vunpack.c.l.b16 %v123
    %v172 = vunpack.c.l.b16 %v124
    %v173 = vpack.c.b16 %v158, %v157
    %v174 = vpack.c.b16 %v160, %v159
    %v175 = vpack.c.b16 %v162, %v161
    %v176 = vpack.c.b16 %v164, %v163
    %v177 = vpack.c.b16 %v166, %v165
    %v178 = vpack.c.b16 %v168, %v167
    %v179 = vpack.c.b16 %v170, %v169
    %v180 = vpack.c.b16 %v172, %v171
    %v205 = vunpack.c.l.b16 %v125
    %v206 = vunpack.c.l.b16 %v126
    %v207 = vunpack.c.l.b16 %v127
    %v208 = vunpack.c.l.b16 %v128
    %v209 = vunpack.c.l.b16 %v129
    %v210 = vunpack.c.l.b16 %v130
    %v211 = vunpack.c.l.b16 %v131
    %v212 = vunpack.c.l.b16 %v132
    %v213 = vunpack.c.l.b16 %v133
    %v214 = vunpack.c.l.b16 %v134
    %v215 = vunpack.c.l.b16 %v135
    %v216 = vunpack.c.l.b16 %v136
    %v217 = vunpack.c.l.b16 %v137
    %v218 = vunpack.c.l.b16 %v138
    %v219 = vunpack.c.l.b16 %v139
    %v220 = vunpack.c.l.b16 %v140
    %v221 = vpack.c.b16 %v206, %v205
    %v222 = vpack.c.b16 %v208, %v207
    %v223 = vpack.c.b16 %v210, %v209
    %v224 = vpack.c.b16 %v212, %v211
    %v225 = vpack.c.b16 %v214, %v213
    %v226 = vpack.c.b16 %v216, %v215
    %v227 = vpack.c.b16 %v218, %v217
    %v228 = vpack.c.b16 %v220, %v219
    %237 = vmatprep.subr.bf16.mxu0 0
    %238 = vmatpush1.bf16.msra.mxu0 %v221
    %239 = vmatprep.subr.bf16.mxu0 0
    %240 = vmatpush1.bf16.msra.mxu0 %v222
    %241 = vmatprep.subr.bf16.mxu0 0
    %242 = vmatpush1.bf16.msra.mxu0 %v223
    %243 = vmatprep.subr.bf16.mxu0 0
    %244 = vmatpush1.bf16.msra.mxu0 %v224
    %245 = vmatprep.subr.bf16.mxu0 0
    %246 = vmatpush1.bf16.msra.mxu0 %v225
    %247 = vmatprep.subr.bf16.mxu0 0
    %248 = vmatpush1.bf16.msra.mxu0 %v226
    %249 = vmatprep.subr.bf16.mxu0 0
    %250 = vmatpush1.bf16.msra.mxu0 %v227
    %251 = vmatprep.subr.bf16.mxu0 0
    %252 = vmatpush1.bf16.msra.mxu0 %v228
    %253 = vmatprep.subr.bf16.mxu0 0
    %254 = vmatpush1.bf16.msra.mxu0 0
    %255 = vmatprep.subr.bf16.mxu0 0
    %256 = vmatpush1.bf16.msra.mxu0 0
    %257 = vmatprep.subr.bf16.mxu0 0
    %258 = vmatpush1.bf16.msra.mxu0 0
    %259 = vmatprep.subr.bf16.mxu0 0
    %260 = vmatpush1.bf16.msra.mxu0 0
    %261 = vmatprep.subr.bf16.mxu0 0
    %262 = vmatpush1.bf16.msra.mxu0 0
    %263 = vmatprep.subr.bf16.mxu0 0
    %264 = vmatpush1.bf16.msra.mxu0 0
    %265 = vmatprep.subr.bf16.mxu0 0
    %266 = vmatpush1.bf16.msra.mxu0 0
    %267 = vmatprep.subr.bf16.mxu0 0
    %268 = vmatpush1.bf16.msra.mxu0 0
    %269 = vmatprep.mubr.bf16.mxu0 0
    %270 = vmatmul.mubr.bf16.gmra.mrb[0].mxu0 %v173
    %v271 = vpop.f32.mrb[0].mxu0
    %v272 = vadd.f32 0.0, %v271
    %v273 = vpop.f32.mrb[0].mxu0
    %v274 = vpop.f32.mrb[0].mxu0
    %v275 = vadd.f32 0.0, %v274
    %v276 = vpop.f32.mrb[0].mxu0
    %277 = vmatprep.mubr.bf16.mxu0 0
    %278 = vmatmul.mubr.bf16.gmra.mrb[0].mxu0 %v174
    %v279 = vpop.f32.mrb[0].mxu0
    %v280 = vadd.f32 0.0, %v279
    %v281 = vpop.f32.mrb[0].mxu0
    %v282 = vpop.f32.mrb[0].mxu0
    %v283 = vadd.f32 0.0, %v282
    %v284 = vpop.f32.mrb[0].mxu0
    %285 = vmatprep.mubr.bf16.mxu0 0
    %286 = vmatmul.mubr.bf16.gmra.mrb[0].mxu0 %v175
    %v287 = vpop.f32.mrb[0].mxu0
    %v288 = vadd.f32 0.0, %v287
    %v289 = vpop.f32.mrb[0].mxu0
    %v290 = vpop.f32.mrb[0].mxu0
    %v291 = vadd.f32 0.0, %v290
    %v292 = vpop.f32.mrb[0].mxu0
    %293 = vmatprep.mubr.bf16.mxu0 0
    %294 = vmatmul.mubr.bf16.gmra.mrb[0].mxu0 %v176
    %v295 = vpop.f32.mrb[0].mxu0
    %v296 = vadd.f32 0.0, %v295
    %v297 = vpop.f32.mrb[0].mxu0
    %v298 = vpop.f32.mrb[0].mxu0
    %v299 = vadd.f32 0.0, %v298
    %v300 = vpop.f32.mrb[0].mxu0
    %301 = vmatprep.mubr.bf16.mxu0 0
    %302 = vmatmul.mubr.bf16.gmra.mrb[0].mxu0 %v177
    %v303 = vpop.f32.mrb[0].mxu0
    %v304 = vadd.f32 0.0, %v303
    %v305 = vpop.f32.mrb[0].mxu0
    %v306 = vpop.f32.mrb[0].mxu0
    %v307 = vadd.f32 0.0, %v306
    %v308 = vpop.f32.mrb[0].mxu0
    %309 = vmatprep.mubr.bf16.mxu0 0
    %310 = vmatmul.mubr.bf16.gmra.mrb[0].mxu0 %v178
    %v311 = vpop.f32.mrb[0].mxu0
    %v312 = vadd.f32 0.0, %v311
    %v313 = vpop.f32.mrb[0].mxu0
    %v314 = vpop.f32.mrb[0].mxu0
    %v315 = vadd.f32 0.0, %v314
    %v316 = vpop.f32.mrb[0].mxu0
    %317 = vmatprep.mubr.bf16.mxu0 0
    %318 = vmatmul.mubr.bf16.gmra.mrb[0].mxu0 %v179
    %v319 = vpop.f32.mrb[0].mxu0
    %v320 = vadd.f32 0.0, %v319
    %v321 = vpop.f32.mrb[0].mxu0
    %v322 = vpop.f32.mrb[0].mxu0
    %v323 = vadd.f32 0.0, %v322
    %v324 = vpop.f32.mrb[0].mxu0
    %325 = vmatprep.mubr.bf16.mxu0 0
    %326 = vmatmul.mubr.bf16.gmra.mrb[0].mxu0 %v180
    %v327 = vpop.f32.mrb[0].mxu0
    %v328 = vadd.f32 0.0, %v327
    %v329 = vpop.f32.mrb[0].mxu0
    %v330 = vpop.f32.mrb[0].mxu0
    %v331 = vadd.f32 0.0, %v330
    %v332 = vpop.f32.mrb[0].mxu0
    %333 = vdwg.mxu0
    %v350 = vunpack.c.l.b16 %v77
    %v351 = vunpack.c.l.b16 %v78
    %v352 = vunpack.c.l.b16 %v79
    %v353 = vunpack.c.l.b16 %v80
    %v354 = vunpack.c.l.b16 %v81
    %v355 = vunpack.c.l.b16 %v82
    %v356 = vunpack.c.l.b16 %v83
    %v357 = vunpack.c.l.b16 %v84
    %v358 = vunpack.c.l.b16 %v85
    %v359 = vunpack.c.l.b16 %v86
    %v360 = vunpack.c.l.b16 %v87
    %v361 = vunpack.c.l.b16 %v88
    %v362 = vunpack.c.l.b16 %v89
    %v363 = vunpack.c.l.b16 %v90
    %v364 = vunpack.c.l.b16 %v91
    %v365 = vunpack.c.l.b16 %v92
    %v366 = vpack.c.b16 %v351, %v350
    %v367 = vpack.c.b16 %v353, %v352
    %v368 = vpack.c.b16 %v355, %v354
    %v369 = vpack.c.b16 %v357, %v356
    %v370 = vpack.c.b16 %v359, %v358
    %v371 = vpack.c.b16 %v361, %v360
    %v372 = vpack.c.b16 %v363, %v362
    %v373 = vpack.c.b16 %v365, %v364
    %v398 = vunpack.c.l.b16 %v93
    %v399 = vunpack.c.l.b16 %v94
    %v400 = vunpack.c.l.b16 %v95
    %v401 = vunpack.c.l.b16 %v96
    %v402 = vunpack.c.l.b16 %v97
    %v403 = vunpack.c.l.b16 %v98
    %v404 = vunpack.c.l.b16 %v99
    %v405 = vunpack.c.l.b16 %v100
    %v406 = vunpack.c.l.b16 %v101
    %v407 = vunpack.c.l.b16 %v102
    %v408 = vunpack.c.l.b16 %v103
    %v409 = vunpack.c.l.b16 %v104
    %v410 = vunpack.c.l.b16 %v105
    %v411 = vunpack.c.l.b16 %v106
    %v412 = vunpack.c.l.b16 %v107
    %v413 = vunpack.c.l.b16 %v108
    %v414 = vpack.c.b16 %v399, %v398
    %v415 = vpack.c.b16 %v401, %v400
    %v416 = vpack.c.b16 %v403, %v402
    %v417 = vpack.c.b16 %v405, %v404
    %v418 = vpack.c.b16 %v407, %v406
    %v419 = vpack.c.b16 %v409, %v408
    %v420 = vpack.c.b16 %v411, %v410
    %v421 = vpack.c.b16 %v413, %v412
    %430 = vmatprep.subr.bf16.mxu0 0
    %431 = vmatpush1.bf16.msra.mxu0 %v414
    %432 = vmatprep.subr.bf16.mxu0 0
    %433 = vmatpush1.bf16.msra.mxu0 %v415
    %434 = vmatprep.subr.bf16.mxu0 0
    %435 = vmatpush1.bf16.msra.mxu0 %v416
    %436 = vmatprep.subr.bf16.mxu0 0
    %437 = vmatpush1.bf16.msra.mxu0 %v417
    %438 = vmatprep.subr.bf16.mxu0 0
    %439 = vmatpush1.bf16.msra.mxu0 %v418
    %440 = vmatprep.subr.bf16.mxu0 0
    %441 = vmatpush1.bf16.msra.mxu0 %v419
    %442 = vmatprep.subr.bf16.mxu0 0
    %443 = vmatpush1.bf16.msra.mxu0 %v420
    %444 = vmatprep.subr.bf16.mxu0 0
    %445 = vmatpush1.bf16.msra.mxu0 %v421
    %446 = vmatprep.subr.bf16.mxu0 0
    %447 = vmatpush1.bf16.msra.mxu0 0
    %448 = vmatprep.subr.bf16.mxu0 0
    %449 = vmatpush1.bf16.msra.mxu0 0
    %450 = vmatprep.subr.bf16.mxu0 0
    %451 = vmatpush1.bf16.msra.mxu0 0
    %452 = vmatprep.subr.bf16.mxu0 0
    %453 = vmatpush1.bf16.msra.mxu0 0
    %454 = vmatprep.subr.bf16.mxu0 0
    %455 = vmatpush1.bf16.msra.mxu0 0
    %456 = vmatprep.subr.bf16.mxu0 0
    %457 = vmatpush1.bf16.msra.mxu0 0
    %458 = vmatprep.subr.bf16.mxu0 0
    %459 = vmatpush1.bf16.msra.mxu0 0
    %460 = vmatprep.subr.bf16.mxu0 0
    %461 = vmatpush1.bf16.msra.mxu0 0
    %462 = vmatprep.mubr.bf16.mxu0 0
    %463 = vmatmul.mubr.bf16.gmra.mrb[0].mxu0 %v366
    %v464 = vpop.f32.mrb[0].mxu0
    %v465 = vadd.f32 %v272, %v464
    %v466 = vpop.f32.mrb[0].mxu0
    %v467 = vpop.f32.mrb[0].mxu0
    %v468 = vadd.f32 %v275, %v467
    %v469 = vpop.f32.mrb[0].mxu0
    %470 = vmatprep.mubr.bf16.mxu0 0
    %471 = vmatmul.mubr.bf16.gmra.mrb[0].mxu0 %v367
    %v472 = vpop.f32.mrb[0].mxu0
    %v473 = vadd.f32 %v280, %v472
    %v474 = vpop.f32.mrb[0].mxu0
    %v475 = vpop.f32.mrb[0].mxu0
    %v476 = vadd.f32 %v283, %v475
    %v477 = vpop.f32.mrb[0].mxu0
    %478 = vmatprep.mubr.bf16.mxu0 0
    %479 = vmatmul.mubr.bf16.gmra.mrb[0].mxu0 %v368
    %v480 = vpop.f32.mrb[0].mxu0
    %v481 = vadd.f32 %v288, %v480
    %v482 = vpop.f32.mrb[0].mxu0
    %v483 = vpop.f32.mrb[0].mxu0
    %v484 = vadd.f32 %v291, %v483
    %v485 = vpop.f32.mrb[0].mxu0
    %486 = vmatprep.mubr.bf16.mxu0 0
    %487 = vmatmul.mubr.bf16.gmra.mrb[0].mxu0 %v369
    %v488 = vpop.f32.mrb[0].mxu0
    %v489 = vadd.f32 %v296, %v488
    %v490 = vpop.f32.mrb[0].mxu0
    %v491 = vpop.f32.mrb[0].mxu0
    %v492 = vadd.f32 %v299, %v491
    %v493 = vpop.f32.mrb[0].mxu0
    %494 = vmatprep.mubr.bf16.mxu0 0
    %495 = vmatmul.mubr.bf16.gmra.mrb[0].mxu0 %v370
    %v496 = vpop.f32.mrb[0].mxu0
    %v497 = vadd.f32 %v304, %v496
    %v498 = vpop.f32.mrb[0].mxu0
    %v499 = vpop.f32.mrb[0].mxu0
    %v500 = vadd.f32 %v307, %v499
    %v501 = vpop.f32.mrb[0].mxu0
    %502 = vmatprep.mubr.bf16.mxu0 0
    %503 = vmatmul.mubr.bf16.gmra.mrb[0].mxu0 %v371
    %v504 = vpop.f32.mrb[0].mxu0
    %v505 = vadd.f32 %v312, %v504
    %v506 = vpop.f32.mrb[0].mxu0
    %v507 = vpop.f32.mrb[0].mxu0
    %v508 = vadd.f32 %v315, %v507
    %v509 = vpop.f32.mrb[0].mxu0
    %510 = vmatprep.mubr.bf16.mxu0 0
    %511 = vmatmul.mubr.bf16.gmra.mrb[0].mxu0 %v372
    %v512 = vpop.f32.mrb[0].mxu0
    %v513 = vadd.f32 %v320, %v512
    %v514 = vpop.f32.mrb[0].mxu0
    %v515 = vpop.f32.mrb[0].mxu0
    %v516 = vadd.f32 %v323, %v515
    %v517 = vpop.f32.mrb[0].mxu0
    %518 = vmatprep.mubr.bf16.mxu0 0
    %519 = vmatmul.mubr.bf16.gmra.mrb[0].mxu0 %v373
    %v520 = vpop.f32.mrb[0].mxu0
    %v521 = vadd.f32 %v328, %v520
    %v522 = vpop.f32.mrb[0].mxu0
    %v523 = vpop.f32.mrb[0].mxu0
    %v524 = vadd.f32 %v331, %v523
    %v525 = vpop.f32.mrb[0].mxu0
    %526 = vdwg.mxu0
    %v527 = vld [vmem:[%s4] sm:$0x1]
    %v529 = vlaneseq
    %v530 = vshrl.u32 %v529, 7
    %v531 = vsub.s32 0, %v530
    %v532 = vrot.slane %v527, %v531
    %v534 = vadd.f32 %v465, %v532
    %v535 = vadd.f32 %v468, %v532
    %v536 = vadd.f32 %v473, %v532
    %v537 = vadd.f32 %v476, %v532
    %v538 = vadd.f32 %v481, %v532
    %v539 = vadd.f32 %v484, %v532
    %v540 = vadd.f32 %v489, %v532
    %v541 = vadd.f32 %v492, %v532
    %v542 = vadd.f32 %v497, %v532
    %v543 = vadd.f32 %v500, %v532
    %v544 = vadd.f32 %v505, %v532
    %v545 = vadd.f32 %v508, %v532
    %v546 = vadd.f32 %v513, %v532
    %v547 = vadd.f32 %v516, %v532
    %v548 = vadd.f32 %v521, %v532
    %v549 = vadd.f32 %v524, %v532
    %v550 = vmax.f32 %v534, 0.0
    %v551 = vmax.f32 %v535, 0.0
    %v552 = vmax.f32 %v536, 0.0
    %v553 = vmax.f32 %v537, 0.0
    %v554 = vmax.f32 %v538, 0.0
    %v555 = vmax.f32 %v539, 0.0
    %v556 = vmax.f32 %v540, 0.0
    %v557 = vmax.f32 %v541, 0.0
    %v558 = vmax.f32 %v542, 0.0
    %v559 = vmax.f32 %v543, 0.0
    %v560 = vmax.f32 %v544, 0.0
    %v561 = vmax.f32 %v545, 0.0
    %v562 = vmax.f32 %v546, 0.0
    %v563 = vmax.f32 %v547, 0.0
    %v564 = vmax.f32 %v548, 0.0
    %v565 = vmax.f32 %v549, 0.0
    %v566 = vpack.c.bf16 %v551, %v550
    %v567 = vpack.c.bf16 %v553, %v552
    %v568 = vpack.c.bf16 %v555, %v554
    %v569 = vpack.c.bf16 %v557, %v556
    %v570 = vpack.c.bf16 %v559, %v558
    %v571 = vpack.c.bf16 %v561, %v560
    %v572 = vpack.c.bf16 %v563, %v562
    %v573 = vpack.c.bf16 %v565, %v564
    %v582 = vunpack.c.l.b16 %v566
    %v583 = vunpack.c.h.b16 %v566
    %v584 = vunpack.c.l.b16 %v567
    %v585 = vunpack.c.h.b16 %v567
    %v586 = vunpack.c.l.b16 %v568
    %v587 = vunpack.c.h.b16 %v568
    %v588 = vunpack.c.l.b16 %v569
    %v589 = vunpack.c.h.b16 %v569
    %v590 = vunpack.c.l.b16 %v570
    %v591 = vunpack.c.h.b16 %v570
    %v592 = vunpack.c.l.b16 %v571
    %v593 = vunpack.c.h.b16 %v571
    %v594 = vunpack.c.l.b16 %v572
    %v595 = vunpack.c.h.b16 %v572
    %v596 = vunpack.c.l.b16 %v573
    %v597 = vunpack.c.h.b16 %v573
    %v598 = vpack.c.b16 %v582, %v582
    %v599 = vpack.c.b16 %v583, %v583
    %v600 = vpack.c.b16 %v584, %v584
    %v601 = vpack.c.b16 %v585, %v585
    %v602 = vpack.c.b16 %v586, %v586
    %v603 = vpack.c.b16 %v587, %v587
    %v604 = vpack.c.b16 %v588, %v588
    %v605 = vpack.c.b16 %v589, %v589
    %v606 = vpack.c.b16 %v590, %v590
    %v607 = vpack.c.b16 %v591, %v591
    %v608 = vpack.c.b16 %v592, %v592
    %v609 = vpack.c.b16 %v593, %v593
    %v610 = vpack.c.b16 %v594, %v594
    %v611 = vpack.c.b16 %v595, %v595
    %v612 = vpack.c.b16 %v596, %v596
    %v613 = vpack.c.b16 %v597, %v597
    %630 = vst [vmem:[#allocation10] sm:$0xf] %v598
    %631 = vst [vmem:[#allocation10 + $0x4] sm:$0xf] %v599
    %632 = vst [vmem:[#allocation10 + $0x8] sm:$0xf] %v600
    %633 = vst [vmem:[#allocation10 + $0xc] sm:$0xf] %v601
    %634 = vst [vmem:[#allocation10 + $0x10] sm:$0xf] %v602
    %635 = vst [vmem:[#allocation10 + $0x14] sm:$0xf] %v603
    %636 = vst [vmem:[#allocation10 + $0x18] sm:$0xf] %v604
    %637 = vst [vmem:[#allocation10 + $0x1c] sm:$0xf] %v605
    %638 = vst [vmem:[#allocation10 + $0x20] sm:$0xf] %v606
    %639 = vst [vmem:[#allocation10 + $0x24] sm:$0xf] %v607
    %640 = vst [vmem:[#allocation10 + $0x28] sm:$0xf] %v608
    %641 = vst [vmem:[#allocation10 + $0x2c] sm:$0xf] %v609
    %642 = vst [vmem:[#allocation10 + $0x30] sm:$0xf] %v610
    %643 = vst [vmem:[#allocation10 + $0x34] sm:$0xf] %v611
    %644 = vst [vmem:[#allocation10 + $0x38] sm:$0xf] %v612
    %645 = vst [vmem:[#allocation10 + $0x3c] sm:$0xf] %v613
    // Predicated region
    $region38: #{tpu_custom_call.1} parent=1 // pred_check
      _
    $region39: #{tpu_custom_call.1} parent=1 // pred_check_branch
      %647 = sbr.rel (0) target = $region41
    $region40: #{tpu_custom_call.1} parent=1 // pred_region
      %s649 = ssub.s32 1024, 1024
      %650 = vsyncadd [#allocation4], %s649
      %s651 = sshll.u32 [#allocation10], 4
      %s652 = int_to_ptr.vmem [resolvable:$true] %s651
      %657 = dma.vmem_to_hbm [thread:$0]  %s652, 1024, %s5, [#allocation4], 64, 64, 4
    $region41: #{tpu_custom_call.1} parent=1 // pred_fallthru
      _
    // Predicated region
    $region42: #{tpu_custom_call.1} parent=1 // pred_check
      _
    $region43: #{tpu_custom_call.1} parent=1 // pred_check_branch
      %659 = sbr.rel (0) target = $region45
    $region44: #{tpu_custom_call.1} parent=1 // pred_region
      %660 = dma.done [#allocation4], 1024
    $region45: #{tpu_custom_call.1} parent=1 // pred_fallthru
      _
    %661 = vsyncpa [#allocation3], 1
    %662 = vsyncpa [#allocation6], 1
    %663 = vsyncpa [#allocation9], 1
    %664 = vsyncpa [#allocation4], 1

</llo_original>
